<compile_context>
chip_gen: v5e
topology: v5e:2x2
jax: 0.10.0
libtpu: 0.0.40
codegen_flags: <defaults>
</compile_context>

<pallas_src>
import functools
import math

import jax
import jax.numpy as jnp
from jax import lax
from jax.experimental import pallas as pl
from jax.experimental.pallas import tpu as pltpu


# ----------------------------- tiled linear ---------------------------------

def _pick_tile(dim, candidates):
    for c in candidates:
        if dim >= c and dim % c == 0:
            return c
    return dim


def _matmul_kernel(x_ref, w_ref, o_ref, acc_ref):
    @pl.when(pl.program_id(2) == 0)
    def _():
        acc_ref[...] = jnp.zeros_like(acc_ref)

    acc_ref[...] += jnp.dot(x_ref[...], w_ref[...],
                            preferred_element_type=jnp.float32)

    @pl.when(pl.program_id(2) == pl.num_programs(2) - 1)
    def _():
        o_ref[...] = acc_ref[...].astype(o_ref.dtype)


def _matmul_bias_kernel(x_ref, w_ref, b_ref, o_ref, acc_ref):
    @pl.when(pl.program_id(2) == 0)
    def _():
        acc_ref[...] = jnp.zeros_like(acc_ref)

    acc_ref[...] += jnp.dot(x_ref[...], w_ref[...],
                            preferred_element_type=jnp.float32)

    @pl.when(pl.program_id(2) == pl.num_programs(2) - 1)
    def _():
        o_ref[...] = (acc_ref[...] + b_ref[...]).astype(o_ref.dtype)


def pallas_matmul(x, w, b=None):
    """x: (M, K) @ w: (K, N) [+ b: (1, N)] -> (M, N), K-tiled with f32 accumulator."""
    M, K = x.shape
    _, N = w.shape
    tm = _pick_tile(M, (256, 128, 64, 32, 16, 8))
    tn = _pick_tile(N, (256, 128))
    tk = _pick_tile(K, (512, 256, 128))

    in_specs = [
        pl.BlockSpec((tm, tk), lambda i, j, k: (i, k)),
        pl.BlockSpec((tk, tn), lambda i, j, k: (k, j)),
    ]
    args = [x, w]
    if b is None:
        kernel = _matmul_kernel
    else:
        in_specs.append(pl.BlockSpec((1, tn), lambda i, j, k: (0, j)))
        args.append(b)
        kernel = _matmul_bias_kernel

    return pl.pallas_call(
        kernel,
        out_shape=jax.ShapeDtypeStruct((M, N), jnp.float32),
        grid=(M // tm, N // tn, K // tk),
        in_specs=in_specs,
        out_specs=pl.BlockSpec((tm, tn), lambda i, j, k: (i, j)),
        scratch_shapes=[pltpu.VMEM((tm, tn), jnp.float32)],
        compiler_params=pltpu.CompilerParams(
            dimension_semantics=("parallel", "parallel", "arbitrary")),
    )(*args)


# ------------------------- flash attention kernel ---------------------------

def _flash_attn_kernel(q_ref, k_ref, v_ref, cosq_ref, sinq_ref, cosk_ref, sink_ref,
                       o_ref, qrot_scr, m_scr, l_scr, acc_scr,
                       *, scale, half_window, causal, tq, tkv):
    qi = pl.program_id(2)
    ki = pl.program_id(3)
    nk = pl.num_programs(3)
    Dh = q_ref.shape[-1]

    @pl.when(ki == 0)
    def _init():
        # RoPE on the q tile, once per q tile; fold in 1/sqrt(Dh); cast to bf16.
        q = q_ref[0].astype(jnp.float32)
        q = (q * cosq_ref[...] +
             pltpu.roll(q, shift=Dh // 2, axis=1) * sinq_ref[...]) * scale
        qrot_scr[...] = q.astype(jnp.bfloat16)
        m_scr[...] = jnp.full_like(m_scr, -1e30)
        l_scr[...] = jnp.zeros_like(l_scr)
        acc_scr[...] = jnp.zeros_like(acc_scr)

    # Tile-level skip: does this (q tile, kv tile) rectangle intersect the
    # sliding-window (and causal) band at all?  Pure scalar math from program ids.
    r0 = qi * tq
    c0 = ki * tkv
    r1 = r0 + (tq - 1)
    c1 = c0 + (tkv - 1)
    relevant = (c0 - r1 <= half_window) & (r0 - c1 <= half_window)
    if causal:
        relevant = relevant & (c0 <= r1)

    @pl.when(relevant)
    def _compute():
        # RoPE on the k tile (only for visited tiles).
        k = k_ref[0].astype(jnp.float32)
        k = k * cosk_ref[...] + pltpu.roll(k, shift=Dh // 2, axis=1) * sink_ref[...]
        k = k.astype(jnp.bfloat16)
        v = v_ref[0].astype(jnp.bfloat16)

        # scores = (q * scale) @ k^T  (bf16 MXU inputs, f32 accumulation)
        s = lax.dot_general(qrot_scr[...], k, (((1,), (1,)), ((), ())),
                            preferred_element_type=jnp.float32)   # (tq, tkv)

        # sliding-window / causal mask generated from iota (no (T,T) table).
        row = r0 + lax.broadcasted_iota(jnp.int32, (tq, tkv), 0)
        col = c0 + lax.broadcasted_iota(jnp.int32, (tq, tkv), 1)
        keep = jnp.abs(row - col) <= half_window
        if causal:
            keep = keep & (col <= row)
        s = jnp.where(keep, s, -1e30)

        # online softmax update
        m_prev = m_scr[...]
        m_new = jnp.maximum(m_prev, jnp.max(s, axis=-1, keepdims=True))
        alpha = jnp.exp(m_prev - m_new)
        p = jnp.exp(s - m_new)
        l_scr[...] = alpha * l_scr[...] + jnp.sum(p, axis=-1, keepdims=True)
        acc_scr[...] = alpha * acc_scr[...] + jnp.dot(
            p.astype(jnp.bfloat16), v, preferred_element_type=jnp.float32)
        m_scr[...] = m_new

    @pl.when(ki == nk - 1)
    def _finalize():
        l = l_scr[...]
        l = jnp.where(l == 0.0, 1.0, l)   # guard fully-masked rows -> no NaN
        o_ref[0] = (acc_scr[...] * pl.reciprocal(l, approx=True)).astype(o_ref.dtype)


def pallas_flash_attention(qkv, cos, sin_rot, *, num_heads, head_dim, scale,
                           half_window, causal, tq=None, tkv=None):
    """qkv: (B, T, 3*H*Dh) fused projection -> context (B, T, H*Dh)."""
    B, T, _ = qkv.shape
    H, Dh = num_heads, head_dim
    if tq is None:
        tq = _pick_tile(T, (256, 128, 64, 32, 16, 8))
    if tkv is None:
        tkv = _pick_tile(T, (256, 128, 64, 32, 16, 8))
    nq, nk = T // tq, T // tkv

    kernel = functools.partial(_flash_attn_kernel, scale=scale,
                               half_window=half_window, causal=causal,
                               tq=tq, tkv=tkv)
    return pl.pallas_call(
        kernel,
        out_shape=jax.ShapeDtypeStruct((B, T, H * Dh), jnp.float32),
        grid=(B, H, nq, nk),
        in_specs=[
            # q / k / v heads are selected from the fused projection layout via
            # the last-dim block index -> no transposes / splits in HBM.
            pl.BlockSpec((1, tq, Dh), lambda b, h, qi, ki: (b, qi, h)),
            pl.BlockSpec((1, tkv, Dh), lambda b, h, qi, ki: (b, ki, H + h)),
            pl.BlockSpec((1, tkv, Dh), lambda b, h, qi, ki: (b, ki, 2 * H + h)),
            pl.BlockSpec((tq, Dh), lambda b, h, qi, ki: (qi, 0)),    # cos (q rows)
            pl.BlockSpec((tq, Dh), lambda b, h, qi, ki: (qi, 0)),    # sign*sin (q rows)
            pl.BlockSpec((tkv, Dh), lambda b, h, qi, ki: (ki, 0)),   # cos (k rows)
            pl.BlockSpec((tkv, Dh), lambda b, h, qi, ki: (ki, 0)),   # sign*sin (k rows)
        ],
        out_specs=pl.BlockSpec((1, tq, Dh), lambda b, h, qi, ki: (b, qi, h)),
        scratch_shapes=[
            pltpu.VMEM((tq, Dh), jnp.bfloat16),   # RoPE'd, scaled q tile
            pltpu.VMEM((tq, 1), jnp.float32),     # running max
            pltpu.VMEM((tq, 1), jnp.float32),     # running denom
            pltpu.VMEM((tq, Dh), jnp.float32),    # output accumulator
        ],
        compiler_params=pltpu.CompilerParams(
            dimension_semantics=("parallel", "parallel", "parallel", "arbitrary")),
    )(qkv, qkv, qkv, cos, sin_rot, cos, sin_rot)


# ------------------------------ module wrapper -------------------------------

def multi_head_attention_forward(x, params, cfg):
    """Pallas implementation of MultiHeadAttention.forward."""
    B, T, Din = x.shape
    H = cfg["num_heads"]
    Dh = cfg["head_dim"]
    Dout = H * Dh

    x2d = x.reshape(B * T, Din)

    # Fused Q/K/V projection (qkv_bias=False -> no bias operand at all).
    qkv = pallas_matmul(x2d, params["Wqkv"])                # (B*T, 3*Dout)
    qkv = qkv.reshape(B, T, 3 * Dout)                       # free reshape

    ctx = pallas_flash_attention(
        qkv, cfg["cos"], cfg["sin_rot"],
        num_heads=H, head_dim=Dh, scale=1.0 / math.sqrt(Dh),
        half_window=cfg["half_window"], causal=cfg["causal"],
        tq=cfg["tq"], tkv=cfg["tkv"])                       # (B, T, Dout)

    out = pallas_matmul(ctx.reshape(B * T, Dout), params["Wo"],
                        params["bo"].reshape(1, Dout))
    return out.reshape(B, T, Dout)


# ----------------------------- reference (jnp) --------------------------------

def reference_forward(x, params, cfg):
    B, T, Din = x.shape
    H = cfg["num_heads"]
    Dh = cfg["head_dim"]
    Dout = H * Dh
    q = (x @ params["Wq"]).reshape(B, T, H, Dh).transpose(0, 2, 1, 3)
    k = (x @ params["Wk"]).reshape(B, T, H, Dh).transpose(0, 2, 1, 3)
    v = (x @ params["Wv"]).reshape(B, T, H, Dh).transpose(0, 2, 1, 3)
    cos, sin = cfg["cos"], cfg["sin"]

    def rotate_half(t):
        h = t.shape[-1] // 2
        return jnp.concatenate([-t[..., h:], t[..., :h]], axis=-1)

    q = q * cos + rotate_half(q) * sin
    k = k * cos + rotate_half(k) * sin
    scores = jnp.einsum("bhqd,bhkd->bhqk", q, k) / math.sqrt(Dh)
    scores = jnp.where(cfg["keep_mask"][None, None], scores, -jnp.inf)
    w = jax.nn.softmax(scores, axis=-1)
    ctx = jnp.einsum("bhqk,bhkd->bhqd", w, v)
    ctx = ctx.transpose(0, 2, 1, 3).reshape(B, T, Dout)
    return ctx @ params["Wo"] + params["bo"]


# ---------------------------------- main --------------------------------------

if __name__ == "__main__":
    # Small, deterministic config (Dh=128 keeps the per-head lane dim MXU/store friendly).
    B, T = 2, 16
    Din = 64
    H = 2
    Dh = 128
    Dout = H * Dh
    sliding_window = 8          # keep iff |i - j| <= sliding_window // 2
    causal = True
    theta = 10000.0
    tq = tkv = 8                # exercises multi-tile online softmax + tile skipping

    key = jax.random.PRNGKey(0)
    k_x, k_q, k_k, k_v, k_o, k_b = jax.random.split(key, 6)

    def init_linear(k, fan_in, fan_out):
        # Stored pre-transposed as (in, out) so no per-call .T copies.
        bound = 1.0 / math.sqrt(fan_in)
        return jax.random.uniform(k, (fan_in, fan_out), jnp.float32, -bound, bound)

    Wq = init_linear(k_q, Din, Dout)
    Wk = init_linear(k_k, Din, Dout)
    Wv = init_linear(k_v, Din, Dout)
    Wo = init_linear(k_o, Dout, Dout)
    bo = jax.random.uniform(k_b, (Dout,), jnp.float32,
                            -1.0 / math.sqrt(Dout), 1.0 / math.sqrt(Dout))
    params = {
        "Wq": Wq, "Wk": Wk, "Wv": Wv, "Wo": Wo, "bo": bo,
        "Wqkv": jnp.concatenate([Wq, Wk, Wv], axis=1),      # (Din, 3*Dout), built once
    }

    # RoPE tables (llama-style), absolute positions 0..T-1.
    inv_freq = 1.0 / (theta ** (jnp.arange(0, Dh, 2, dtype=jnp.float32) / Dh))
    pos = jnp.arange(T, dtype=jnp.float32)
    angles = pos[:, None] * inv_freq[None, :]                # (T, Dh/2)
    emb = jnp.concatenate([angles, angles], axis=-1)         # (T, Dh)
    cos, sin = jnp.cos(emb), jnp.sin(emb)
    # rotate_half(x) == pltpu.roll(x, Dh//2, axis=-1) * sign  -> fold sign into sin.
    sign = jnp.concatenate([-jnp.ones((Dh // 2,), jnp.float32),
                            jnp.ones((Dh // 2,), jnp.float32)])
    sin_rot = sin * sign[None, :]

    # Reference mask (True = keep) mirroring the PyTorch buffers.
    idx = jnp.arange(T)
    keep_mask = jnp.abs(idx[:, None] - idx[None, :]) <= sliding_window // 2
    if causal:
        keep_mask = keep_mask & (idx[None, :] <= idx[:, None])

    cfg = dict(num_heads=H, head_dim=Dh, cos=cos, sin=sin, sin_rot=sin_rot,
               keep_mask=keep_mask, half_window=sliding_window // 2,
               causal=causal, tq=tq, tkv=tkv)

    x = jax.random.normal(k_x, (B, T, Din), jnp.float32)

    out = multi_head_attention_forward(x, params, cfg)
    out = jax.block_until_ready(out)

    ref = jax.block_until_ready(reference_forward(x, params, cfg))
    assert out.shape == (B, T, Dout)
    # bf16 MXU inputs inside the attention kernel -> compare with a bf16-level tolerance.
    assert bool(jnp.allclose(out, ref, atol=2e-2, rtol=2e-2)), "mismatch vs reference"

    print("KERNEL_OK")
</pallas_src>

<mosaic_0001>
module attributes {stable_mosaic.version = 11 : i64} {
  func.func @_matmul_kernel(%arg0: i32, %arg1: i32, %arg2: i32, %arg3: memref<32x64xf32, #tpu.memory_space<vmem>>, %arg4: memref<64x256xf32, #tpu.memory_space<vmem>>, %arg5: memref<32x256xf32, #tpu.memory_space<vmem>>, %arg6: memref<32x256xf32, #tpu.memory_space<vmem>>) attributes {dimension_semantics = [#tpu.dimension_semantics<parallel>, #tpu.dimension_semantics<parallel>, #tpu.dimension_semantics<arbitrary>], iteration_bounds = array<i64: 1, 3, 1>, scalar_prefetch = 0 : i64, scratch_operands = 1 : i64, tpu.core_type = #tpu.core_type<tc>, window_params = [{transform_indices = @transform_0, window_bounds = array<i64: 32, 64>}, {transform_indices = @transform_1, window_bounds = array<i64: 64, 256>}, {transform_indices = @transform_2, window_bounds = array<i64: 32, 256>}]} {
    %c0_i32 = arith.constant 0 : i32
    %0 = arith.cmpi eq, %arg2, %c0_i32 : i32
    %1 = arith.extui %0 : i1 to i32
    %c0_i32_0 = arith.constant 0 : i32
    %2 = arith.cmpi ne, %1, %c0_i32_0 : i32
    scf.if %2 {
      %cst_10 = arith.constant 0.000000e+00 : f32
      %12 = vector.broadcast %cst_10 : f32 to vector<32x256xf32>
      %c0_11 = arith.constant 0 : index
      %c0_12 = arith.constant 0 : index
      %13 = vector.load %arg6[%c0_11, %c0_12] : memref<32x256xf32, #tpu.memory_space<vmem>>, vector<32x256xf32>
      tpu.vector_store %arg6[%c0_11, %c0_12], %12 {strides = array<i32>} : memref<32x256xf32, #tpu.memory_space<vmem>>, vector<32x256xf32>,
    } else {
    }
    %c0 = arith.constant 0 : index
    %c0_1 = arith.constant 0 : index
    %3 = vector.load %arg6[%c0, %c0_1] : memref<32x256xf32, #tpu.memory_space<vmem>>, vector<32x256xf32>
    %c0_2 = arith.constant 0 : index
    %c0_3 = arith.constant 0 : index
    %4 = vector.load %arg3[%c0_2, %c0_3] : memref<32x64xf32, #tpu.memory_space<vmem>>, vector<32x64xf32>
    %c0_4 = arith.constant 0 : index
    %c0_5 = arith.constant 0 : index
    %5 = vector.load %arg4[%c0_4, %c0_5] : memref<64x256xf32, #tpu.memory_space<vmem>>, vector<64x256xf32>
    %cst = arith.constant dense<0.000000e+00> : vector<32x256xf32>
    %6 = tpu.matmul %4, %5, %cst {dimension_numbers = #tpu.dot_dimension_numbers<[1], [0], [0], [1], [0, 0, 1, 1], [], []>} : vector<32x64xf32>, vector<64x256xf32>, vector<32x256xf32> -> vector<32x256xf32>
    %7 = arith.addf %3, %6 : vector<32x256xf32>
    %c0_6 = arith.constant 0 : index
    %c0_7 = arith.constant 0 : index
    %8 = vector.load %arg6[%c0_6, %c0_7] : memref<32x256xf32, #tpu.memory_space<vmem>>, vector<32x256xf32>
    tpu.vector_store %arg6[%c0_6, %c0_7], %7 {strides = array<i32>} : memref<32x256xf32, #tpu.memory_space<vmem>>, vector<32x256xf32>,
    %c0_i32_8 = arith.constant 0 : i32
    %9 = arith.cmpi eq, %arg2, %c0_i32_8 : i32
    %10 = arith.extui %9 : i1 to i32
    %c0_i32_9 = arith.constant 0 : i32
    %11 = arith.cmpi ne, %10, %c0_i32_9 : i32
    scf.if %11 {
      %c0_10 = arith.constant 0 : index
      %c0_11 = arith.constant 0 : index
      %12 = vector.load %arg6[%c0_10, %c0_11] : memref<32x256xf32, #tpu.memory_space<vmem>>, vector<32x256xf32>
      %c0_12 = arith.constant 0 : index
      %c0_13 = arith.constant 0 : index
      %13 = vector.load %arg5[%c0_12, %c0_13] : memref<32x256xf32, #tpu.memory_space<vmem>>, vector<32x256xf32>
      tpu.vector_store %arg5[%c0_12, %c0_13], %12 {strides = array<i32>} : memref<32x256xf32, #tpu.memory_space<vmem>>, vector<32x256xf32>,
    } else {
    }
    return
  }
  func.func @transform_0(%arg0: i32, %arg1: i32, %arg2: i32) -> (i32, i32) {
    %c0_i32 = arith.constant 0 : i32
    return %arg0, %arg2 : i32, i32
  }
  func.func @transform_1(%arg0: i32, %arg1: i32, %arg2: i32) -> (i32, i32) {
    %c0_i32 = arith.constant 0 : i32
    return %arg2, %arg1 : i32, i32
  }
  func.func @transform_2(%arg0: i32, %arg1: i32, %arg2: i32) -> (i32, i32) {
    %c0_i32 = arith.constant 0 : i32
    return %arg0, %arg1 : i32, i32
  }
}

</mosaic_0001>

<llo_original>
// kernel: tpu_custom_call.1
$region0: #{tpu_custom_call.1}
  #allocation0 [shape = 'u32[]', space=smem, size = 0x4, offset = 0x4, fixed_abs, tag = 'smem constant byte address 0x4 - core index']
  #allocation1 [shape = 'u32[72,128]{1,0:T(1,128)}', space=vmem, size = 0x9000, scoped, tag = 'internal scratch']
  #allocation2 [shape = 'f32[32,256]{1,0:T(8,128)}', space=vmem, size = 0x8000, scoped, tag = 'scratch operand']
  %s0 = inlined_call_operand.hbm [shape: f32[32,64], index: 0, kind: input, shape index: {}]
  %s1 = inlined_call_operand.hbm [shape: f32[64,768], index: 1, kind: input, shape index: {}]
  %s2 = inlined_call_operand.hbm [shape: f32[32,768], index: 2, kind: output, shape index: {}]
  %s3 = sld [smem:[#allocation0]]
  $region57: #{tpu_custom_call.1} parent=0
    _
  %s5 = ssub.s32 1, %s3
  %s6 = scalar_select 0, %s5, %s3
  $region1: #{tpu_custom_call.1} parent=0
    #allocation3 [shape = 'u8[16384]{0}', space=vmem, size = 0x4000, scoped, tag = 'input window, operand 0, single buffered']
    #allocation4 [shape = 's32[2]{0}', space=sflag, size = 0x8, scoped, tag = 'scoped memory for tpu_custom_call.1']
    #allocation5 [shape = 's32[2]{0}', space=sflag, size = 0x8, scoped, tag = 'scoped memory for tpu_custom_call.1']
    #allocation6 [shape = 'u8[131072]{0}', space=vmem, size = 0x20000, scoped, tag = 'input window, operand 1']
    #allocation7 [shape = 's32[2]{0}', space=sflag, size = 0x8, scoped, tag = 'scoped memory for tpu_custom_call.1']
    #allocation8 [shape = 'u8[65536]{0}', space=vmem, size = 0x10000, scoped, tag = 'output window, operand 0']
    %7 = vsyncpa [#allocation4], 0
    %8 = vsyncpa [#allocation7], 0
    %s9 = scalar_lea.sflag [#allocation7], 1
    %10 = vsyncpa %s9, 0
    %11 = vsyncpa [#allocation5], 0
    %s12 = scalar_lea.sflag [#allocation5], 1
    %13 = vsyncpa %s12, 0
    loop: start=0, step=1, limit=5
    $region2: #{tpu_custom_call.1} parent=1 // loop_pre_header
      _
    $region3: #{tpu_custom_call.1} parent=1 // loop_header
      %s15 = sphi 0, %s19
      %p16 = scmp.ge.s32.totalorder %s15, 5
      %s22 = sphi 0, %s41
      %s23 = sphi 0, %s37
      %s24 = sphi 0, %s33
      %s25 = sphi 0, %s22
      %s26 = sphi 0, %s23
      %s27 = sphi 0, %s24
      %s28 = sphi 0, %s25
      %s29 = sphi 0, %s26
      %s30 = sphi 0, %s27
      %s46 = sphi 0, %s48
      %s49 = sphi 0, %s46
      %s50 = sphi 0, %s49
      %s66 = sphi 0, %s50
      %s74 = sphi 0, %s76
      %s77 = sphi 0, %s74
      %s78 = sphi 0, %s77
      %s94 = sphi 0, %s78
      %s102 = sphi 0, %s104
      %s105 = sphi 0, %s102
      %s106 = sphi 0, %s105
      %s122 = sphi 0, %s106
    $region4: #{tpu_custom_call.1} parent=1 // loop_header_branch
      %18 = sbr.rel (%p16) target = $region8
    $region5: #{tpu_custom_call.1} parent=1 // loop_body
      %s20 = ssub.s32 %s15, 1
      %s21 = ssub.s32 %s15, 2
      %s31 = sadd.s32 1, %s24
      %p32 = scmp.ge.s32.totalorder %s31, 1
      %s33 = scalar_select %p32, 0, %s31
      %s34 = sadd.s32 1, %s23
      %s35 = scalar_select %p32, %s34, %s23
      %p36 = scmp.ge.s32.totalorder %s35, 3
      %s37 = scalar_select %p36, 0, %s35
      %s38 = sadd.s32 1, %s22
      %s39 = scalar_select %p36, %s38, %s22
      %p40 = scmp.ge.s32.totalorder %s39, 1
      %s41 = scalar_select %p40, 0, %s39
      %s42 = ssub.s32 %s22, %s41
      %s43 = ssub.s32 %s24, %s33
      %s44 = sor.u32 %s42, %s43
      %p45 = scmp.eq.s32.totalorder %s44, 0
      %s47 = sadd.s32 %s46, 1
      %s48 = scalar_select %p45, %s46, %s47
      %p51 = pneg %p45
      %p52 = scmp.eq.s32.totalorder %s15, 2
      %p53 = por %p51, %p52
      %p54 = scmp.ne.s32.totalorder %s46, %s49
      %p55 = scmp.eq.s32.totalorder %s15, 0
      %p56 = por %p54, %p55
      %p57 = scmp.ne.s32.totalorder %s46, %s49
      %p58 = scmp.eq.s32.totalorder %s20, 2
      %p59 = por %p57, %p58
      %p60 = scmp.ne.s32.totalorder %s49, %s50
      %p61 = scmp.eq.s32.totalorder %s20, 0
      %p62 = por %p60, %p61
      %p63 = scmp.ne.s32.totalorder %s49, %s50
      %p64 = scmp.eq.s32.totalorder %s21, 2
      %p65 = por %p63, %p64
      %p67 = scmp.ne.s32.totalorder %s50, %s66
      %p68 = scmp.eq.s32.totalorder %s21, 0
      %p69 = por %p67, %p68
      %s70 = ssub.s32 %s24, %s33
      %s71 = ssub.s32 %s23, %s37
      %s72 = sor.u32 %s70, %s71
      %p73 = scmp.eq.s32.totalorder %s72, 0
      %s75 = sadd.s32 %s74, 1
      %s76 = scalar_select %p73, %s74, %s75
      %p79 = pneg %p73
      %p80 = scmp.eq.s32.totalorder %s15, 2
      %p81 = por %p79, %p80
      %p82 = scmp.ne.s32.totalorder %s74, %s77
      %p83 = scmp.eq.s32.totalorder %s15, 0
      %p84 = por %p82, %p83
      %p85 = scmp.ne.s32.totalorder %s74, %s77
      %p86 = scmp.eq.s32.totalorder %s20, 2
      %p87 = por %p85, %p86
      %p88 = scmp.ne.s32.totalorder %s77, %s78
      %p89 = scmp.eq.s32.totalorder %s20, 0
      %p90 = por %p88, %p89
      %p91 = scmp.ne.s32.totalorder %s77, %s78
      %p92 = scmp.eq.s32.totalorder %s21, 2
      %p93 = por %p91, %p92
      %p95 = scmp.ne.s32.totalorder %s78, %s94
      %p96 = scmp.eq.s32.totalorder %s21, 0
      %p97 = por %p95, %p96
      %s98 = ssub.s32 %s22, %s41
      %s99 = ssub.s32 %s23, %s37
      %s100 = sor.u32 %s98, %s99
      %p101 = scmp.eq.s32.totalorder %s100, 0
      %s103 = sadd.s32 %s102, 1
      %s104 = scalar_select %p101, %s102, %s103
      %p107 = pneg %p101
      %p108 = scmp.eq.s32.totalorder %s15, 2
      %p109 = por %p107, %p108
      %p110 = scmp.ne.s32.totalorder %s102, %s105
      %p111 = scmp.eq.s32.totalorder %s15, 0
      %p112 = por %p110, %p111
      %p113 = scmp.ne.s32.totalorder %s102, %s105
      %p114 = scmp.eq.s32.totalorder %s20, 2
      %p115 = por %p113, %p114
      %p116 = scmp.ne.s32.totalorder %s105, %s106
      %p117 = scmp.eq.s32.totalorder %s20, 0
      %p118 = por %p116, %p117
      %p119 = scmp.ne.s32.totalorder %s105, %s106
      %p120 = scmp.eq.s32.totalorder %s21, 2
      %p121 = por %p119, %p120
      %p123 = scmp.ne.s32.totalorder %s106, %s122
      %p124 = scmp.eq.s32.totalorder %s21, 0
      %p125 = por %p123, %p124
      %p126 = scmp.le.s32.totalorder 1, %s15
      %p127 = scmp.lt.s32.totalorder %s15, 4
      %p128 = pnand %p126, %p127
      %p129 = pneg %p128
      // Predicated region
      $region9: #{tpu_custom_call.1} parent=5 // pred_check
        _
      $region10: #{tpu_custom_call.1} parent=5 // pred_check_branch
        %131 = sbr.rel (%p128) target = $region12
      $region11: #{tpu_custom_call.1} parent=5 // pred_region
        %s132 = ssub.s32 %s15, 1
        // Predicated region
        $region13: #{tpu_custom_call.1} parent=11 // pred_check
          %p133 = pneg %p62
        $region14: #{tpu_custom_call.1} parent=11 // pred_check_branch
          %135 = sbr.rel (%p133) target = $region16
        $region15: #{tpu_custom_call.1} parent=11 // pred_region
          %s136 = smul.u32 4, %s25
          %138 = vsyncadd [#allocation4], 0
          %s139 = sadd.s32 %s27, %s136
          %s140 = smul.addr %s139, 8
          %s141 = scalar_lea.hbm %s0, %s140
          %s142 = sshll.u32 %s141, 4
          %s143 = int_to_ptr.hbm [resolvable:$true] %s142
          %s144 = sshll.u32 [#allocation3], 4
          %s145 = int_to_ptr.vmem [resolvable:$true] %s144
          %150 = dma.hbm_to_vmem [thread:$0]  %s143, 512, %s145, [#allocation4], 128, 128, 8
        $region16: #{tpu_custom_call.1} parent=11 // pred_fallthru
          _
      $region12: #{tpu_custom_call.1} parent=5 // pred_fallthru
        _
      %p151 = scmp.lt.s32.totalorder %s15, 3
      // Predicated region
      $region17: #{tpu_custom_call.1} parent=5 // pred_check
        %p152 = pneg %p151
      $region18: #{tpu_custom_call.1} parent=5 // pred_check_branch
        %154 = sbr.rel (%p152) target = $region20
      $region19: #{tpu_custom_call.1} parent=5 // pred_region
        // Predicated region
        $region21: #{tpu_custom_call.1} parent=19 // pred_check
          %p155 = pneg %p84
        $region22: #{tpu_custom_call.1} parent=19 // pred_check_branch
          %157 = sbr.rel (%p155) target = $region24
        $region23: #{tpu_custom_call.1} parent=19 // pred_region
          %s158 = sand.u32 %s74, 1
          %s159 = scalar_lea.sflag [#allocation7], %s158
          %s160 = sand.u32 %s74, 1
          %s161 = smul.addr %s160, 128
          %s162 = scalar_lea.vmem [#allocation6], %s161
          %s163 = smul.u32 8, %s24
          %s164 = smul.u32 2, %s23
          %166 = vsyncadd %s159, 0
          %s167 = smul.addr %s163, 6
          %s168 = sadd.s32 %s164, %s167
          %s169 = smul.addr %s168, 8
          %s170 = scalar_lea.hbm %s1, %s169
          %s171 = sshll.u32 %s170, 4
          %s172 = int_to_ptr.hbm [resolvable:$true] %s171
          %s173 = sshll.u32 %s162, 4
          %s174 = int_to_ptr.vmem [resolvable:$true] %s173
          %179 = dma.hbm_to_vmem [thread:$0]  %s172, 2048, %s174, %s159, 768, 256, 16
        $region24: #{tpu_custom_call.1} parent=19 // pred_fallthru
          _
      $region20: #{tpu_custom_call.1} parent=5 // pred_fallthru
        _
      %p180 = scmp.le.s32.totalorder 1, %s15
      %p181 = scmp.lt.s32.totalorder %s15, 4
      %p182 = pnand %p180, %p181
      %p183 = pneg %p182
      // Predicated region
      $region25: #{tpu_custom_call.1} parent=5 // pred_check
        _
      $region26: #{tpu_custom_call.1} parent=5 // pred_check_branch
        %185 = sbr.rel (%p182) target = $region28
      $region27: #{tpu_custom_call.1} parent=5 // pred_region
        %s186 = ssub.s32 %s15, 1
        // Predicated region
        $region29: #{tpu_custom_call.1} parent=27 // pred_check
          %p187 = pneg %p62
        $region30: #{tpu_custom_call.1} parent=27 // pred_check_branch
          %189 = sbr.rel (%p187) target = $region32
        $region31: #{tpu_custom_call.1} parent=27 // pred_region
          %191 = dma.done [#allocation4], 512
        $region32: #{tpu_custom_call.1} parent=27 // pred_fallthru
          _
        %s192 = sand.u32 %s77, 1
        %s193 = scalar_lea.sflag [#allocation7], %s192
        %s194 = sand.u32 %s77, 1
        %s195 = smul.addr %s194, 128
        %s196 = scalar_lea.vmem [#allocation6], %s195
        // Predicated region
        $region33: #{tpu_custom_call.1} parent=27 // pred_check
          %p197 = pneg %p90
        $region34: #{tpu_custom_call.1} parent=27 // pred_check_branch
          %199 = sbr.rel (%p197) target = $region36
        $region35: #{tpu_custom_call.1} parent=27 // pred_region
          %201 = dma.done %s193, 2048
        $region36: #{tpu_custom_call.1} parent=27 // pred_fallthru
          _
        %p202 = pneg %p62
        %p203 = pneg %p59
        %s204 = sand.u32 %s77, 1
        %s205 = scalar_lea.sflag [#allocation7], %s204
        %s206 = sand.u32 %s77, 1
        %s207 = smul.addr %s206, 128
        %s208 = scalar_lea.vmem [#allocation6], %s207
        %p209 = pneg %p90
        %p210 = pneg %p87
        %p211 = pneg %p118
        %p212 = pneg %p115
        %s213 = sand.u32 %s105, 1
        %s214 = scalar_lea.sflag [#allocation5], %s213
        %s215 = sand.u32 %s105, 1
        %s216 = smul.addr %s215, 64
        %s217 = scalar_lea.vmem [#allocation8], %s216
        %s218 = smul.u32 4, %s25
        %s219 = smul.u32 8, %s27
        %s220 = smul.u32 2, %s26
        %s221 = smul.u32 4, %s25
        %s222 = smul.u32 2, %s26
        %p223 = scmp.eq.s32.totalorder %s27, 0
        // Predicated region
        $region37: #{tpu_custom_call.1} parent=27 // pred_check
          %p224 = pneg %p223
        $region38: #{tpu_custom_call.1} parent=27 // pred_check_branch
          %226 = sbr.rel (%p224) target = $region40
        $region39: #{tpu_custom_call.1} parent=27 // pred_region
          %227 = vst [vmem:[#allocation2] sm:$0xff] 0.0
          %228 = vst [vmem:[#allocation2 + $0x8] sm:$0xff] 0.0
          %229 = vst [vmem:[#allocation2 + $0x10] sm:$0xff] 0.0
          %230 = vst [vmem:[#allocation2 + $0x18] sm:$0xff] 0.0
          %231 = vst [vmem:[#allocation2 + $0x20] sm:$0xff] 0.0
          %232 = vst [vmem:[#allocation2 + $0x28] sm:$0xff] 0.0
          %233 = vst [vmem:[#allocation2 + $0x30] sm:$0xff] 0.0
          %234 = vst [vmem:[#allocation2 + $0x38] sm:$0xff] 0.0
        $region40: #{tpu_custom_call.1} parent=27 // pred_fallthru
          _
        %v235 = vld [vmem:[#allocation2] sm:$0xff]
        %v236 = vld [vmem:[#allocation2 + $0x8] sm:$0xff]
        %v237 = vld [vmem:[#allocation2 + $0x10] sm:$0xff]
        %v238 = vld [vmem:[#allocation2 + $0x18] sm:$0xff]
        %v239 = vld [vmem:[#allocation2 + $0x20] sm:$0xff]
        %v240 = vld [vmem:[#allocation2 + $0x28] sm:$0xff]
        %v241 = vld [vmem:[#allocation2 + $0x30] sm:$0xff]
        %v242 = vld [vmem:[#allocation2 + $0x38] sm:$0xff]
        %v243 = vld [vmem:[#allocation3] sm:$0xff]
        %v244 = vld [vmem:[#allocation3 + $0x8] sm:$0xff]
        %v245 = vld [vmem:[#allocation3 + $0x10] sm:$0xff]
        %v246 = vld [vmem:[#allocation3 + $0x18] sm:$0xff]
        %v247 = vld [vmem:[%s196] sm:$0xff]
        %v248 = vld [vmem:[%s196 + $0x8] sm:$0xff]
        %v249 = vld [vmem:[%s196 + $0x10] sm:$0xff]
        %v250 = vld [vmem:[%s196 + $0x18] sm:$0xff]
        %v251 = vld [vmem:[%s196 + $0x20] sm:$0xff]
        %v252 = vld [vmem:[%s196 + $0x28] sm:$0xff]
        %v253 = vld [vmem:[%s196 + $0x30] sm:$0xff]
        %v254 = vld [vmem:[%s196 + $0x38] sm:$0xff]
        %v255 = vld [vmem:[%s196 + $0x40] sm:$0xff]
        %v256 = vld [vmem:[%s196 + $0x48] sm:$0xff]
        %v257 = vld [vmem:[%s196 + $0x50] sm:$0xff]
        %v258 = vld [vmem:[%s196 + $0x58] sm:$0xff]
        %v259 = vld [vmem:[%s196 + $0x60] sm:$0xff]
        %v260 = vld [vmem:[%s196 + $0x68] sm:$0xff]
        %v261 = vld [vmem:[%s196 + $0x70] sm:$0xff]
        %v262 = vld [vmem:[%s196 + $0x78] sm:$0xff]
        %vm263 = vcmask 523264
        %v265 = vsel %vm263, %v243, 0
        %v268 = vsel %vm263, %v244, 0
        %v271 = vsel %vm263, %v245, 0
        %v274 = vsel %vm263, %v246, 0
        %276 = vmatpush.msra.mxu0 0.0
        %277 = vmatpush.msra.mxu0 0.0
        %278 = vmatpush.msra.mxu0 0.0
        %279 = vmatpush.msra.mxu0 0.0
        %280 = vmatpush.msra.mxu0 0.0
        %281 = vmatpush.msra.mxu0 0.0
        %282 = vmatpush.msra.mxu0 0.0
        %283 = vmatpush.msra.mxu0 0.0
        %284 = vmatpush.msra.mxu0 %v261
        %285 = vmatpush.msra.mxu0 %v259
        %286 = vmatpush.msra.mxu0 %v257
        %287 = vmatpush.msra.mxu0 %v255
        %288 = vmatpush.msra.mxu0 %v253
        %289 = vmatpush.msra.mxu0 %v251
        %290 = vmatpush.msra.mxu0 %v249
        %291 = vmatpush.msra.mxu0 %v247
        %292 = vmatmul.f32.gmra.mxu0 %v265
        %v293 = vpop.f32.mrf.mxu0
        %v294 = vadd.f32 0.0, %v293
        %295 = vmatmul.f32.gmra.mxu0 %v268
        %v296 = vpop.f32.mrf.mxu0
        %v297 = vadd.f32 0.0, %v296
        %298 = vmatmul.f32.gmra.mxu0 %v271
        %v299 = vpop.f32.mrf.mxu0
        %v300 = vadd.f32 0.0, %v299
        %301 = vmatmul.f32.gmra.mxu0 %v274
        %v302 = vpop.f32.mrf.mxu0
        %v303 = vadd.f32 0.0, %v302
        %304 = vdwg.mxu0
        %305 = vmatpush.msra.mxu0 0.0
        %306 = vmatpush.msra.mxu0 0.0
        %307 = vmatpush.msra.mxu0 0.0
        %308 = vmatpush.msra.mxu0 0.0
        %309 = vmatpush.msra.mxu0 0.0
        %310 = vmatpush.msra.mxu0 0.0
        %311 = vmatpush.msra.mxu0 0.0
        %312 = vmatpush.msra.mxu0 0.0
        %313 = vmatpush.msra.mxu0 %v262
        %314 = vmatpush.msra.mxu0 %v260
        %315 = vmatpush.msra.mxu0 %v258
        %316 = vmatpush.msra.mxu0 %v256
        %317 = vmatpush.msra.mxu0 %v254
        %318 = vmatpush.msra.mxu0 %v252
        %319 = vmatpush.msra.mxu0 %v250
        %320 = vmatpush.msra.mxu0 %v248
        %321 = vmatmul.f32.gmra.mxu0 %v265
        %v322 = vpop.f32.mrf.mxu0
        %v323 = vadd.f32 0.0, %v322
        %324 = vmatmul.f32.gmra.mxu0 %v268
        %v325 = vpop.f32.mrf.mxu0
        %v326 = vadd.f32 0.0, %v325
        %327 = vmatmul.f32.gmra.mxu0 %v271
        %v328 = vpop.f32.mrf.mxu0
        %v329 = vadd.f32 0.0, %v328
        %330 = vmatmul.f32.gmra.mxu0 %v274
        %v331 = vpop.f32.mrf.mxu0
        %v332 = vadd.f32 0.0, %v331
        %333 = vdwg.mxu0
        %v334 = vadd.f32 %v235, %v294
        %v335 = vadd.f32 %v236, %v323
        %v336 = vadd.f32 %v237, %v297
        %v337 = vadd.f32 %v238, %v326
        %v338 = vadd.f32 %v239, %v300
        %v339 = vadd.f32 %v240, %v329
        %v340 = vadd.f32 %v241, %v303
        %v341 = vadd.f32 %v242, %v332
        %342 = vst [vmem:[#allocation2] sm:$0xff] %v334
        %343 = vst [vmem:[#allocation2 + $0x8] sm:$0xff] %v335
        %344 = vst [vmem:[#allocation2 + $0x10] sm:$0xff] %v336
        %345 = vst [vmem:[#allocation2 + $0x18] sm:$0xff] %v337
        %346 = vst [vmem:[#allocation2 + $0x20] sm:$0xff] %v338
        %347 = vst [vmem:[#allocation2 + $0x28] sm:$0xff] %v339
        %348 = vst [vmem:[#allocation2 + $0x30] sm:$0xff] %v340
        %349 = vst [vmem:[#allocation2 + $0x38] sm:$0xff] %v341
        // Predicated region
        $region41: #{tpu_custom_call.1} parent=27 // pred_check
          %p350 = pneg %p223
        $region42: #{tpu_custom_call.1} parent=27 // pred_check_branch
          %352 = sbr.rel (%p350) target = $region44
        $region43: #{tpu_custom_call.1} parent=27 // pred_region
          %v353 = vld [vmem:[#allocation2] sm:$0xff]
          %v354 = vld [vmem:[#allocation2 + $0x8] sm:$0xff]
          %v355 = vld [vmem:[#allocation2 + $0x10] sm:$0xff]
          %v356 = vld [vmem:[#allocation2 + $0x18] sm:$0xff]
          %v357 = vld [vmem:[#allocation2 + $0x20] sm:$0xff]
          %v358 = vld [vmem:[#allocation2 + $0x28] sm:$0xff]
          %v359 = vld [vmem:[#allocation2 + $0x30] sm:$0xff]
          %v360 = vld [vmem:[#allocation2 + $0x38] sm:$0xff]
          %361 = vst [vmem:[%s217] sm:$0xff] %v353
          %362 = vst [vmem:[%s217 + $0x8] sm:$0xff] %v354
          %363 = vst [vmem:[%s217 + $0x10] sm:$0xff] %v355
          %364 = vst [vmem:[%s217 + $0x18] sm:$0xff] %v356
          %365 = vst [vmem:[%s217 + $0x20] sm:$0xff] %v357
          %366 = vst [vmem:[%s217 + $0x28] sm:$0xff] %v358
          %367 = vst [vmem:[%s217 + $0x30] sm:$0xff] %v359
          %368 = vst [vmem:[%s217 + $0x38] sm:$0xff] %v360
        $region44: #{tpu_custom_call.1} parent=27 // pred_fallthru
          _
        %s369 = sand.u32 %s105, 1
        %s370 = scalar_lea.sflag [#allocation5], %s369
        %s371 = sand.u32 %s105, 1
        %s372 = smul.addr %s371, 64
        %s373 = scalar_lea.vmem [#allocation8], %s372
        // Predicated region
        $region45: #{tpu_custom_call.1} parent=27 // pred_check
          %p374 = pneg %p115
        $region46: #{tpu_custom_call.1} parent=27 // pred_check_branch
          %376 = sbr.rel (%p374) target = $region48
        $region47: #{tpu_custom_call.1} parent=27 // pred_region
          %s377 = smul.u32 4, %s25
          %s378 = smul.u32 2, %s26
          %380 = vsyncadd %s370, 0
          %s381 = smul.addr %s377, 6
          %s382 = sadd.s32 %s378, %s381
          %s383 = smul.addr %s382, 8
          %s384 = scalar_lea.hbm %s2, %s383
          %s385 = sshll.u32 %s373, 4
          %s386 = int_to_ptr.vmem [resolvable:$true] %s385
          %s387 = sshll.u32 %s384, 4
          %s388 = int_to_ptr.hbm [resolvable:$true] %s387
          %393 = dma.vmem_to_hbm [thread:$0]  %s386, 1024, %s388, %s370, 256, 768, 16
        $region48: #{tpu_custom_call.1} parent=27 // pred_fallthru
          _
      $region28: #{tpu_custom_call.1} parent=5 // pred_fallthru
        _
      %p394 = scmp.le.s32.totalorder 2, %s15
      // Predicated region
      $region49: #{tpu_custom_call.1} parent=5 // pred_check
        %p395 = pneg %p394
      $region50: #{tpu_custom_call.1} parent=5 // pred_check_branch
        %397 = sbr.rel (%p395) target = $region52
      $region51: #{tpu_custom_call.1} parent=5 // pred_region
        %s398 = ssub.s32 %s15, 2
        // Predicated region
        $region53: #{tpu_custom_call.1} parent=51 // pred_check
          %p399 = pneg %p121
        $region54: #{tpu_custom_call.1} parent=51 // pred_check_branch
          %401 = sbr.rel (%p399) target = $region56
        $region55: #{tpu_custom_call.1} parent=51 // pred_region
          %s402 = sand.u32 %s106, 1
          %s403 = scalar_lea.sflag [#allocation5], %s402
          %s404 = sand.u32 %s106, 1
          %s405 = smul.addr %s404, 64
          %s406 = scalar_lea.vmem [#allocation8], %s405
          %408 = dma.done %s403, 1024
        $region56: #{tpu_custom_call.1} parent=51 // pred_fallthru
          _
      $region52: #{tpu_custom_call.1} parent=5 // pred_fallthru
        _
    $region6: #{tpu_custom_call.1} parent=1 // loop_footer
      %s19 = sadd.s32 1, %s15
    $region7: #{tpu_custom_call.1} parent=1 // loop_footer_branch
      %14 = sbr.rel target = $region3
    $region8: #{tpu_custom_call.1} parent=1 // loop_exit
      _
    %409 = vsyncpa [#allocation4], 1
    %s410 = scalar_lea.sflag [#allocation4], 1
    %411 = vsyncpa %s410, 1
    %412 = vsyncpa [#allocation7], 1
    %s413 = scalar_lea.sflag [#allocation7], 1
    %414 = vsyncpa %s413, 1
    %415 = vsyncpa [#allocation5], 1
    %s416 = scalar_lea.sflag [#allocation5], 1
    %417 = vsyncpa %s416, 1

</llo_original>
